<compile_context>
chip_gen: v7x
topology: tpu7x:2x2x1
jax: 0.10.0
libtpu: 0.0.40
codegen_flags: <defaults>
</compile_context>

<pallas_src>
import jax
import jax.numpy as jnp
from jax.experimental import pallas as pl
from jax.experimental.pallas import tpu as pltpu


HP = 128      # padded hidden width (lane-dense); real hidden width is 20
HIDDEN = 20   # logical hidden width of the MLP
MAX_TB = 256  # rows per grid block (sweepable 128-512; 256 fits easily in VMEM)


def net_kernel(x1_ref, x2_ref, x3_ref, scal_ref, vec_ref, w_ref, out_ref):
    x1 = x1_ref[...]                     # (tb, 1)
    x2 = x2_ref[...]                     # (tb, 1)
    x3 = x3_ref[...]                     # (tb, 1)

    # SMEM scalars: [weight1, Linear(1,1).W, Linear(1,1).b, final MLP bias]
    w1 = scal_ref[0]
    w2 = scal_ref[1]
    b2 = scal_ref[2]
    bd = scal_ref[3]

    # Packed parameter rows, each (1, HP), zero beyond column HIDDEN-1.
    wa_row = vec_ref[0:1, :]             # Linear(1,20) weight as a row
    ba_row = vec_ref[1:2, :]             # Linear(1,20) bias
    bb_row = vec_ref[2:3, :]             # Linear(20,20) #1 bias
    bc_row = vec_ref[3:4, :]             # Linear(20,20) #2 bias
    wd_row = vec_ref[4:5, :]             # Linear(20,1) weight (transposed row)

    # --- output1 / output2: pure VPU (no MXU for K=1) ---------------------
    o1 = x1 * w1                                            # (tb, 1)
    o2 = x2 * w2 + b2                                       # (tb, 1)

    # --- output3: MLP on 128-lane padded tiles -----------------------------
    # Layer 1 (in=1): (tb,1)*(1,HP) broadcast multiply on the VPU.
    h = jnp.tanh(x3 * wa_row + ba_row)                      # (tb, HP)
    # Layers 2 & 3 (20x20): genuine matmuls on the MXU.  Zero padding is
    # exact: padded lanes stay 0 because tanh(0) == 0.
    h = jnp.tanh(
        jnp.dot(h, w_ref[0], preferred_element_type=jnp.float32) + bb_row)
    h = jnp.tanh(
        jnp.dot(h, w_ref[1], preferred_element_type=jnp.float32) + bc_row)
    # Layer 4 (out=1): elementwise multiply + lane reduction (VPU + XLU).
    o3 = jnp.sum(h * wd_row, axis=-1, keepdims=True) + bd   # (tb, 1)

    # --- lane-dense output slab: col0=output1, col1=output2, col2=output3 --
    # Zero-init (one unmasked full-block store) + three masked column stores.
    out_ref[...] = jnp.zeros_like(out_ref)
    out_ref[:, 0:1] = o1
    out_ref[:, 1:2] = o2
    out_ref[:, 2:3] = o3


def pack_params(params, hp=HP):
    """Pack/pad parameters once, outside the kernel.

    Returns:
      scalars: (4,)      f32 SMEM  [w1, W2, b2, b_out]
      vec:     (8,hp)    f32 VMEM  rows: wa, ba, bb, bc, wd^T, 0, 0, 0
      w:       (2,hp,hp) f32 VMEM  [wb padded, wc padded]
    """
    f32 = jnp.float32

    def pad_row(row):    # (1, k) -> (1, hp)
        return jnp.pad(row.astype(f32), ((0, 0), (0, hp - row.shape[1])))

    def pad_mat(m):      # (a, b) -> (hp, hp)
        return jnp.pad(m.astype(f32),
                       ((0, hp - m.shape[0]), (0, hp - m.shape[1])))

    vec = jnp.zeros((8, hp), f32)
    vec = vec.at[0:1].set(pad_row(params["wa"]))
    vec = vec.at[1:2].set(pad_row(params["ba"]))
    vec = vec.at[2:3].set(pad_row(params["bb"]))
    vec = vec.at[3:4].set(pad_row(params["bc"]))
    vec = vec.at[4:5].set(pad_row(params["wd"].T))

    w = jnp.stack([pad_mat(params["wb"]), pad_mat(params["wc"])])

    scalars = jnp.stack([
        params["w1"][0, 0], params["w2"][0, 0],
        params["b2"][0, 0], params["bd"][0, 0],
    ]).astype(f32)

    return {"scalars": scalars, "vec": vec, "w": w}


def net_forward(packed, input1, input2, input3):
    """Whole forward pass in a single Pallas call.

    Returns the lane-dense (n_pad, HP) output slab:
      column 0 = output1, column 1 = output2, column 2 = output3.
    Use split_outputs() (or slice once at the consumer) to get the three
    logical outputs; keeping the slab avoids per-call tiny slice ops.
    """
    n1, n2, n3 = input1.shape[0], input2.shape[0], input3.shape[0]
    n = max(n1, n2, n3)

    # Grid blocking: TB rows per block (multiple of 8), batch axis "parallel"
    # so v7x's two TensorCores split it; weights stay resident across blocks.
    tb = min(MAX_TB, ((n + 7) // 8) * 8)
    n_pad = ((n + tb - 1) // tb) * tb
    grid = (n_pad // tb,)

    def prep(x):
        x = x.astype(jnp.float32)
        if x.shape[0] != n_pad:   # no-op (and no extra XLA op) when sizes match
            x = jnp.pad(x, ((0, n_pad - x.shape[0]), (0, 0)))
        return x

    x1, x2, x3 = prep(input1), prep(input2), prep(input3)

    x_spec = pl.BlockSpec((tb, 1), lambda i: (i, 0))
    scal_spec = pl.BlockSpec((4,), lambda i: (0,),
                             memory_space=pltpu.MemorySpace.SMEM)
    vec_spec = pl.BlockSpec((8, HP), lambda i: (0, 0))
    w_spec = pl.BlockSpec((2, HP, HP), lambda i: (0, 0, 0))
    out_spec = pl.BlockSpec((tb, HP), lambda i: (i, 0))

    cost = pl.CostEstimate(
        flops=2 * 2 * n_pad * HP * HP,            # two HPxHP matmuls
        transcendentals=3 * n_pad * HP,           # three tanh layers
        bytes_accessed=(3 * n_pad * 4             # inputs
                        + n_pad * HP * 4          # output slab
                        + 8 * HP * 4              # packed vectors
                        + 2 * HP * HP * 4         # padded weights
                        + 4 * 4),                 # SMEM scalars
    )

    out = pl.pallas_call(
        net_kernel,
        out_shape=jax.ShapeDtypeStruct((n_pad, HP), jnp.float32),
        grid=grid,
        in_specs=[x_spec, x_spec, x_spec, scal_spec, vec_spec, w_spec],
        out_specs=out_spec,
        compiler_params=pltpu.CompilerParams(
            dimension_semantics=("parallel",)),
        cost_estimate=cost,
    )(x1, x2, x3, packed["scalars"], packed["vec"], packed["w"])

    return out


def split_outputs(slab, n1, n2, n3):
    """Single place that slices the lane-dense slab into the three outputs.
    Rows >= n_i in column i are padding artifacts; never consume them."""
    return slab[:n1, 0:1], slab[:n2, 1:2], slab[:n3, 2:3]


def init_params(key):
    """Deterministic parameter init matching the shapes of Net.__init__.

    PyTorch Linear stores W as (out, in); here we keep (in, out) so the math
    is y = x @ W + b."""
    keys = jax.random.split(key, 12)
    k = iter(keys)

    def lin(kw, kb, fan_in, fan_out):
        bound = 1.0 / jnp.sqrt(jnp.float32(fan_in))
        w = jax.random.uniform(kw, (fan_in, fan_out), jnp.float32, -bound, bound)
        b = jax.random.uniform(kb, (1, fan_out), jnp.float32, -bound, bound)
        return w, b

    params = {}
    params["w1"] = jax.random.normal(next(k), (1, 1), jnp.float32)      # weight1
    params["w2"], params["b2"] = lin(next(k), next(k), 1, 1)            # Linear(1,1)
    params["wa"], params["ba"] = lin(next(k), next(k), 1, HIDDEN)       # lin1
    params["wb"], params["bb"] = lin(next(k), next(k), HIDDEN, HIDDEN)  # lin2
    params["wc"], params["bc"] = lin(next(k), next(k), HIDDEN, HIDDEN)  # lin3
    params["wd"], params["bd"] = lin(next(k), next(k), HIDDEN, 1)       # lin4
    return params


def net_forward_ref(params, x1, x2, x3):
    """Pure-JAX reference for correctness checking (unpacked params)."""
    o1 = x1 * params["w1"]
    o2 = x2 @ params["w2"] + params["b2"]
    h = jnp.tanh(x3 @ params["wa"] + params["ba"])
    h = jnp.tanh(h @ params["wb"] + params["bb"])
    h = jnp.tanh(h @ params["wc"] + params["cc"] if False else h @ params["wc"] + params["bc"])
    o3 = h @ params["wd"] + params["bd"]
    return o1, o2, o3


if __name__ == "__main__":
    key = jax.random.PRNGKey(0)
    kp, k1, k2, k3 = jax.random.split(key, 4)

    params = init_params(kp)
    packed = pack_params(params)   # pad / pack once, outside the kernel

    batch = 8
    # The module's Linear layers imply a trailing feature dim of 1.
    input1 = jax.random.normal(k1, (batch, 1), jnp.float32)
    input2 = jax.random.normal(k2, (batch, 1), jnp.float32)
    input3 = jax.random.normal(k3, (batch, 1), jnp.float32)

    slab = net_forward(packed, input1, input2, input3)
    jax.block_until_ready(slab)

    o1, o2, o3 = split_outputs(slab, batch, batch, batch)
    r1, r2, r3 = net_forward_ref(params, input1, input2, input3)
    assert jnp.allclose(o1, r1, atol=1e-5), "output1 mismatch"
    assert jnp.allclose(o2, r2, atol=1e-5), "output2 mismatch"
    assert jnp.allclose(o3, r3, atol=1e-5), "output3 mismatch"

    # Also exercise the gridded (multi-block, "parallel" batch axis) path.
    big = 640  # > MAX_TB -> grid of 3 blocks on the batch axis
    b1 = jax.random.normal(k1, (big, 1), jnp.float32)
    b2 = jax.random.normal(k2, (big, 1), jnp.float32)
    b3 = jax.random.normal(k3, (big, 1), jnp.float32)
    big_slab = net_forward(packed, b1, b2, b3)
    jax.block_until_ready(big_slab)
    g1, g2, g3 = split_outputs(big_slab, big, big, big)
    s1, s2, s3 = net_forward_ref(params, b1, b2, b3)
    assert jnp.allclose(g1, s1, atol=1e-5), "gridded output1 mismatch"
    assert jnp.allclose(g2, s2, atol=1e-5), "gridded output2 mismatch"
    assert jnp.allclose(g3, s3, atol=1e-5), "gridded output3 mismatch"

    print("KERNEL_OK")
</pallas_src>

<mosaic_0001>
module attributes {stable_mosaic.version = 11 : i64} {
  func.func @net_kernel(%arg0: i32, %arg1: memref<8x1xf32, #tpu.memory_space<vmem>>, %arg2: memref<8x1xf32, #tpu.memory_space<vmem>>, %arg3: memref<8x1xf32, #tpu.memory_space<vmem>>, %arg4: memref<4xf32, #tpu.memory_space<smem>>, %arg5: memref<8x128xf32, #tpu.memory_space<vmem>>, %arg6: memref<2x128x128xf32, #tpu.memory_space<vmem>>, %arg7: memref<8x128xf32, #tpu.memory_space<vmem>>) attributes {dimension_semantics = [#tpu.dimension_semantics<parallel>], iteration_bounds = array<i64: 1>, scalar_prefetch = 0 : i64, scratch_operands = 0 : i64, tpu.core_type = #tpu.core_type<tc>, window_params = [{transform_indices = @transform_0, window_bounds = array<i64: 8, 1>}, {transform_indices = @transform_1, window_bounds = array<i64: 8, 1>}, {transform_indices = @transform_2, window_bounds = array<i64: 8, 1>}, {transform_indices = @transform_3, window_bounds = array<i64: 4>}, {pipeline_mode = #tpu.pipeline_mode<synchronous>, transform_indices = @transform_4, window_bounds = array<i64: 8, 128>}, {pipeline_mode = #tpu.pipeline_mode<synchronous>, transform_indices = @transform_5, window_bounds = array<i64: 2, 128, 128>}, {transform_indices = @transform_6, window_bounds = array<i64: 8, 128>}]} {
    %c0 = arith.constant 0 : index
    %c0_0 = arith.constant 0 : index
    %0 = vector.load %arg1[%c0, %c0_0] : memref<8x1xf32, #tpu.memory_space<vmem>>, vector<8x1xf32>
    %c0_1 = arith.constant 0 : index
    %c0_2 = arith.constant 0 : index
    %1 = vector.load %arg2[%c0_1, %c0_2] : memref<8x1xf32, #tpu.memory_space<vmem>>, vector<8x1xf32>
    %c0_3 = arith.constant 0 : index
    %c0_4 = arith.constant 0 : index
    %2 = vector.load %arg3[%c0_3, %c0_4] : memref<8x1xf32, #tpu.memory_space<vmem>>, vector<8x1xf32>
    %c0_5 = arith.constant 0 : index
    %3 = memref.load %arg4[%c0_5] : memref<4xf32, #tpu.memory_space<smem>>
    %c1 = arith.constant 1 : index
    %4 = memref.load %arg4[%c1] : memref<4xf32, #tpu.memory_space<smem>>
    %c2 = arith.constant 2 : index
    %5 = memref.load %arg4[%c2] : memref<4xf32, #tpu.memory_space<smem>>
    %c3 = arith.constant 3 : index
    %6 = memref.load %arg4[%c3] : memref<4xf32, #tpu.memory_space<smem>>
    %c0_6 = arith.constant 0 : index
    %c0_7 = arith.constant 0 : index
    %7 = vector.load %arg5[%c0_6, %c0_7] : memref<8x128xf32, #tpu.memory_space<vmem>>, vector<1x128xf32>
    %c1_8 = arith.constant 1 : index
    %c0_9 = arith.constant 0 : index
    %8 = vector.load %arg5[%c1_8, %c0_9] : memref<8x128xf32, #tpu.memory_space<vmem>>, vector<1x128xf32>
    %c2_10 = arith.constant 2 : index
    %c0_11 = arith.constant 0 : index
    %9 = vector.load %arg5[%c2_10, %c0_11] : memref<8x128xf32, #tpu.memory_space<vmem>>, vector<1x128xf32>
    %c3_12 = arith.constant 3 : index
    %c0_13 = arith.constant 0 : index
    %10 = vector.load %arg5[%c3_12, %c0_13] : memref<8x128xf32, #tpu.memory_space<vmem>>, vector<1x128xf32>
    %c4 = arith.constant 4 : index
    %c0_14 = arith.constant 0 : index
    %11 = vector.load %arg5[%c4, %c0_14] : memref<8x128xf32, #tpu.memory_space<vmem>>, vector<1x128xf32>
    %12 = vector.broadcast %3 : f32 to vector<8x1xf32>
    %13 = arith.mulf %0, %12 : vector<8x1xf32>
    %14 = vector.broadcast %4 : f32 to vector<8x1xf32>
    %15 = arith.mulf %1, %14 : vector<8x1xf32>
    %16 = vector.broadcast %5 : f32 to vector<8x1xf32>
    %17 = arith.addf %15, %16 : vector<8x1xf32>
    %18 = vector.broadcast %2 : vector<8x1xf32> to vector<8x128xf32>
    %19 = vector.broadcast %7 : vector<1x128xf32> to vector<8x128xf32>
    %20 = arith.mulf %18, %19 : vector<8x128xf32>
    %21 = vector.broadcast %8 : vector<1x128xf32> to vector<8x128xf32>
    %22 = arith.addf %20, %21 : vector<8x128xf32>
    %23 = math.tanh %22 : vector<8x128xf32>
    %c0_15 = arith.constant 0 : index
    %c0_16 = arith.constant 0 : index
    %c0_17 = arith.constant 0 : index
    %24 = vector.load %arg6[%c0_15, %c0_16, %c0_17] : memref<2x128x128xf32, #tpu.memory_space<vmem>>, vector<1x128x128xf32>
    %25 = vector.shape_cast %24 : vector<1x128x128xf32> to vector<128x128xf32>
    %cst = arith.constant dense<0.000000e+00> : vector<8x128xf32>
    %26 = tpu.matmul %23, %25, %cst {dimension_numbers = #tpu.dot_dimension_numbers<[1], [0], [0], [1], [0, 0, 1, 1], [], []>} : vector<8x128xf32>, vector<128x128xf32>, vector<8x128xf32> -> vector<8x128xf32>
    %27 = vector.broadcast %9 : vector<1x128xf32> to vector<8x128xf32>
    %28 = arith.addf %26, %27 : vector<8x128xf32>
    %29 = math.tanh %28 : vector<8x128xf32>
    %c1_18 = arith.constant 1 : index
    %c0_19 = arith.constant 0 : index
    %c0_20 = arith.constant 0 : index
    %30 = vector.load %arg6[%c1_18, %c0_19, %c0_20] : memref<2x128x128xf32, #tpu.memory_space<vmem>>, vector<1x128x128xf32>
    %31 = vector.shape_cast %30 : vector<1x128x128xf32> to vector<128x128xf32>
    %cst_21 = arith.constant dense<0.000000e+00> : vector<8x128xf32>
    %32 = tpu.matmul %29, %31, %cst_21 {dimension_numbers = #tpu.dot_dimension_numbers<[1], [0], [0], [1], [0, 0, 1, 1], [], []>} : vector<8x128xf32>, vector<128x128xf32>, vector<8x128xf32> -> vector<8x128xf32>
    %33 = vector.broadcast %10 : vector<1x128xf32> to vector<8x128xf32>
    %34 = arith.addf %32, %33 : vector<8x128xf32>
    %35 = math.tanh %34 : vector<8x128xf32>
    %36 = vector.broadcast %11 : vector<1x128xf32> to vector<8x128xf32>
    %37 = arith.mulf %35, %36 : vector<8x128xf32>
    %cst_22 = arith.constant dense<0.000000e+00> : vector<8xf32>
    %38 = vector.multi_reduction <add>, %37, %cst_22 [1] : vector<8x128xf32> to vector<8xf32>
    %39 = vector.shape_cast %38 : vector<8xf32> to vector<8x1xf32>
    %40 = vector.broadcast %6 : f32 to vector<8x1xf32>
    %41 = arith.addf %39, %40 : vector<8x1xf32>
    %cst_23 = arith.constant 0.000000e+00 : f32
    %42 = vector.broadcast %cst_23 : f32 to vector<8x128xf32>
    %c0_24 = arith.constant 0 : index
    %c0_25 = arith.constant 0 : index
    %43 = vector.load %arg7[%c0_24, %c0_25] : memref<8x128xf32, #tpu.memory_space<vmem>>, vector<8x128xf32>
    tpu.vector_store %arg7[%c0_24, %c0_25], %42 {strides = array<i32>} : memref<8x128xf32, #tpu.memory_space<vmem>>, vector<8x128xf32>,
    %c0_26 = arith.constant 0 : index
    %c0_27 = arith.constant 0 : index
    %44 = vector.load %arg7[%c0_26, %c0_27] : memref<8x128xf32, #tpu.memory_space<vmem>>, vector<8x1xf32>
    tpu.vector_store %arg7[%c0_26, %c0_27], %13 {strides = array<i32>} : memref<8x128xf32, #tpu.memory_space<vmem>>, vector<8x1xf32>,
    %c0_28 = arith.constant 0 : index
    %c1_29 = arith.constant 1 : index
    %45 = vector.load %arg7[%c0_28, %c1_29] : memref<8x128xf32, #tpu.memory_space<vmem>>, vector<8x1xf32>
    tpu.vector_store %arg7[%c0_28, %c1_29], %17 {strides = array<i32>} : memref<8x128xf32, #tpu.memory_space<vmem>>, vector<8x1xf32>,
    %c0_30 = arith.constant 0 : index
    %c2_31 = arith.constant 2 : index
    %46 = vector.load %arg7[%c0_30, %c2_31] : memref<8x128xf32, #tpu.memory_space<vmem>>, vector<8x1xf32>
    tpu.vector_store %arg7[%c0_30, %c2_31], %41 {strides = array<i32>} : memref<8x128xf32, #tpu.memory_space<vmem>>, vector<8x1xf32>,
    return
  }
  func.func @transform_0(%arg0: i32) -> (i32, i32) {
    %c0_i32 = arith.constant 0 : i32
    %c0_i32_0 = arith.constant 0 : i32
    return %arg0, %c0_i32 : i32, i32
  }
  func.func @transform_1(%arg0: i32) -> (i32, i32) {
    %c0_i32 = arith.constant 0 : i32
    %c0_i32_0 = arith.constant 0 : i32
    return %arg0, %c0_i32 : i32, i32
  }
  func.func @transform_2(%arg0: i32) -> (i32, i32) {
    %c0_i32 = arith.constant 0 : i32
    %c0_i32_0 = arith.constant 0 : i32
    return %arg0, %c0_i32 : i32, i32
  }
  func.func @transform_3(%arg0: i32) -> i32 {
    %c0_i32 = arith.constant 0 : i32
    %c0_i32_0 = arith.constant 0 : i32
    return %c0_i32 : i32
  }
  func.func @transform_4(%arg0: i32) -> (i32, i32) {
    %c0_i32 = arith.constant 0 : i32
    %c0_i32_0 = arith.constant 0 : i32
    %c0_i32_1 = arith.constant 0 : i32
    return %c0_i32, %c0_i32_0 : i32, i32
  }
  func.func @transform_5(%arg0: i32) -> (i32, i32, i32) {
    %c0_i32 = arith.constant 0 : i32
    %c0_i32_0 = arith.constant 0 : i32
    %c0_i32_1 = arith.constant 0 : i32
    %c0_i32_2 = arith.constant 0 : i32
    return %c0_i32, %c0_i32_0, %c0_i32_1 : i32, i32, i32
  }
  func.func @transform_6(%arg0: i32) -> (i32, i32) {
    %c0_i32 = arith.constant 0 : i32
    %c0_i32_0 = arith.constant 0 : i32
    return %arg0, %c0_i32 : i32, i32
  }
}

</mosaic_0001>

<llo_original>
// kernel: tpu_custom_call.1
$region0: #{tpu_custom_call.1}
  #allocation0 [shape = 'u32[]', space=smem, size = 0x4, offset = 0x4, fixed_abs, tag = 'smem constant byte address 0x4 - core index']
  #allocation1 [shape = 'u32[144,128]{1,0:T(1,128)}', space=vmem, size = 0x12000, scoped, tag = 'internal scratch']
  %s0 = inlined_call_operand.vmem [shape: f32[8,1], index: 0, kind: input, shape index: {}]
  %s1 = inlined_call_operand.vmem [shape: f32[8,1], index: 1, kind: input, shape index: {}]
  %s2 = inlined_call_operand.vmem [shape: f32[8,1], index: 2, kind: input, shape index: {}]
  %s3 = inlined_call_operand.vmem [shape: f32[4], index: 3, kind: input, shape index: {}]
  %s4 = inlined_call_operand.vmem [shape: f32[8,128], index: 4, kind: input, shape index: {}]
  %s5 = inlined_call_operand.hbm [shape: f32[2,128,128], index: 5, kind: input, shape index: {}]
  %s6 = inlined_call_operand.hbm [shape: f32[8,128], index: 6, kind: output, shape index: {}]
  %s7 = sld [smem:[#allocation0]]
  $region42: #{tpu_custom_call.1} parent=0
    _
  %s9 = ssub.s32 1, %s7
  %s10 = scalar_select 0, %s9, %s7
  $region1: #{tpu_custom_call.1} parent=0
    #allocation2 [shape = 'u8[512]{0}', space=smem, size = 0x200, scoped, tag = 'input window, operand 3, single buffered']
    #allocation3 [shape = 's32[1]{0}', space=sflag, size = 0x4, scoped, tag = 'scoped memory for tpu_custom_call.1']
    #allocation4 [shape = 's32[1]{0}', space=sflag, size = 0x4, scoped, tag = 'scoped memory for tpu_custom_call.1']
    #allocation5 [shape = 's32[1]{0}', space=sflag, size = 0x4, scoped, tag = 'scoped memory for tpu_custom_call.1']
    #allocation6 [shape = 'u8[131072]{0}', space=vmem, size = 0x20000, scoped, tag = 'input window, operand 5, single buffered']
    #allocation7 [shape = 'u8[4096]{0}', space=vmem, size = 0x1000, scoped, tag = 'output window, operand 0, single buffered']
    %11 = vsyncpa [#allocation5], 0
    %12 = vsyncpa [#allocation3], 0
    %13 = vsyncpa [#allocation4], 0
    // Predicated region
    $region2: #{tpu_custom_call.1} parent=1 // pred_check
      _
    $region3: #{tpu_custom_call.1} parent=1 // pred_check_branch
      %15 = sbr.rel (0) target = $region5
    $region4: #{tpu_custom_call.1} parent=1 // pred_region
      _
    $region5: #{tpu_custom_call.1} parent=1 // pred_fallthru
      _
    // Predicated region
    $region6: #{tpu_custom_call.1} parent=1 // pred_check
      _
    $region7: #{tpu_custom_call.1} parent=1 // pred_check_branch
      %17 = sbr.rel (0) target = $region9
    $region8: #{tpu_custom_call.1} parent=1 // pred_region
      _
    $region9: #{tpu_custom_call.1} parent=1 // pred_fallthru
      _
    // Predicated region
    $region10: #{tpu_custom_call.1} parent=1 // pred_check
      _
    $region11: #{tpu_custom_call.1} parent=1 // pred_check_branch
      %19 = sbr.rel (0) target = $region13
    $region12: #{tpu_custom_call.1} parent=1 // pred_region
      _
    $region13: #{tpu_custom_call.1} parent=1 // pred_fallthru
      _
    // Predicated region
    $region14: #{tpu_custom_call.1} parent=1 // pred_check
      _
    $region15: #{tpu_custom_call.1} parent=1 // pred_check_branch
      %21 = sbr.rel (0) target = $region17
    $region16: #{tpu_custom_call.1} parent=1 // pred_region
      %s23 = ssub.s32 16, 16
      %24 = vsyncadd [#allocation5], %s23
      %s26 = sshll.u32 %s3, 4
      %s27 = int_to_ptr.vmem [resolvable:$true] %s26
      %29 = dma.vmem_to_smem %s27, 16, [#allocation2], [#allocation5]
    $region17: #{tpu_custom_call.1} parent=1 // pred_fallthru
      _
    // Predicated region
    $region18: #{tpu_custom_call.1} parent=1 // pred_check
      _
    $region19: #{tpu_custom_call.1} parent=1 // pred_check_branch
      %31 = sbr.rel (0) target = $region21
    $region20: #{tpu_custom_call.1} parent=1 // pred_region
      _
    $region21: #{tpu_custom_call.1} parent=1 // pred_fallthru
      _
    // Predicated region
    $region22: #{tpu_custom_call.1} parent=1 // pred_check
      _
    $region23: #{tpu_custom_call.1} parent=1 // pred_check_branch
      %33 = sbr.rel (0) target = $region25
    $region24: #{tpu_custom_call.1} parent=1 // pred_region
      %s35 = ssub.s32 4096, 4096
      %36 = vsyncadd [#allocation3], %s35
      %s37 = sshll.u32 [#allocation6], 4
      %s38 = int_to_ptr.vmem [resolvable:$true] %s37
      %43 = dma.hbm_to_vmem [thread:$0]  %s5, 4096, %s38, [#allocation3], 128, 128, 8
    $region25: #{tpu_custom_call.1} parent=1 // pred_fallthru
      _
    // Predicated region
    $region26: #{tpu_custom_call.1} parent=1 // pred_check
      _
    $region27: #{tpu_custom_call.1} parent=1 // pred_check_branch
      %45 = sbr.rel (0) target = $region29
    $region28: #{tpu_custom_call.1} parent=1 // pred_region
      %46 = dma.done [#allocation5], 16
    $region29: #{tpu_custom_call.1} parent=1 // pred_fallthru
      _
    // Predicated region
    $region30: #{tpu_custom_call.1} parent=1 // pred_check
      _
    $region31: #{tpu_custom_call.1} parent=1 // pred_check_branch
      %48 = sbr.rel (0) target = $region33
    $region32: #{tpu_custom_call.1} parent=1 // pred_region
      %49 = dma.done [#allocation3], 4096
    $region33: #{tpu_custom_call.1} parent=1 // pred_fallthru
      _
    %50 = sfence
    %v51 = vld [vmem:[%s0] sm:$0xff]
    %v52 = vld [vmem:[%s1] sm:$0xff]
    %v53 = vld [vmem:[%s2] sm:$0xff]
    %s54 = sld [smem:[#allocation2]]
    %s55 = sld [smem:[#allocation2 + $0x1]]
    %s56 = sld [smem:[#allocation2 + $0x2]]
    %s57 = sld [smem:[#allocation2 + $0x3]]
    %v58 = vld [vmem:[%s4] sm:$0x1]
    %v59 = vld [vmem:[%s4 + $0x1] sm:$0x1]
    %v60 = vld [vmem:[%s4 + $0x2] sm:$0x1]
    %v61 = vld [vmem:[%s4 + $0x3] sm:$0x1]
    %v62 = vld [vmem:[%s4 + $0x4] sm:$0x1]
    %v63 = vstv %s54
    %v64 = vmul.f32 %v51, %v63
    %v65 = vstv %s55
    %v66 = vmul.f32 %v52, %v65
    %v67 = vstv %s56
    %v68 = vadd.f32 %v66, %v67
    %70 = vset.pattern.permute.xlu0 0
    %71 = vperm.xlu0 %70, %v53
    %v72 = vpop.permute.xlu0 %71
    %v74 = vlaneseq
    %v75 = vshrl.u32 %v74, 7
    %v76 = vsub.s32 0, %v75
    %v77 = vrot.slane %v58, %v76
    %v78 = vmul.f32 %v72, %v77
    %v79 = vlaneseq
    %v80 = vshrl.u32 %v79, 7
    %v81 = vsub.s32 0, %v80
    %v82 = vrot.slane %v59, %v81
    %v83 = vadd.f32 %v78, %v82
    %v84 = vtanh.pop %v83
    %v85 = vld [vmem:[#allocation6] sm:$0xff]
    %v86 = vld [vmem:[#allocation6 + $0x8] sm:$0xff]
    %v87 = vld [vmem:[#allocation6 + $0x10] sm:$0xff]
    %v88 = vld [vmem:[#allocation6 + $0x18] sm:$0xff]
    %v89 = vld [vmem:[#allocation6 + $0x20] sm:$0xff]
    %v90 = vld [vmem:[#allocation6 + $0x28] sm:$0xff]
    %v91 = vld [vmem:[#allocation6 + $0x30] sm:$0xff]
    %v92 = vld [vmem:[#allocation6 + $0x38] sm:$0xff]
    %v93 = vld [vmem:[#allocation6 + $0x40] sm:$0xff]
    %v94 = vld [vmem:[#allocation6 + $0x48] sm:$0xff]
    %v95 = vld [vmem:[#allocation6 + $0x50] sm:$0xff]
    %v96 = vld [vmem:[#allocation6 + $0x58] sm:$0xff]
    %v97 = vld [vmem:[#allocation6 + $0x60] sm:$0xff]
    %v98 = vld [vmem:[#allocation6 + $0x68] sm:$0xff]
    %v99 = vld [vmem:[#allocation6 + $0x70] sm:$0xff]
    %v100 = vld [vmem:[#allocation6 + $0x78] sm:$0xff]
    %v101 = vlaneseq
    %v102 = vshrl.u32 %v101, 7
    %v103 = vsub.s32 0, %v102
    %v104 = vrot.slane %v60, %v103
    %105 = vmatprep.subr.mxu0 0.0
    %106 = vmatpush1.msra.mxu0 %v85
    %107 = vmatprep.subr.mxu0 0.0
    %108 = vmatpush1.msra.mxu0 %v86
    %109 = vmatprep.subr.mxu0 0.0
    %110 = vmatpush1.msra.mxu0 %v87
    %111 = vmatprep.subr.mxu0 0.0
    %112 = vmatpush1.msra.mxu0 %v88
    %113 = vmatprep.subr.mxu0 0.0
    %114 = vmatpush1.msra.mxu0 %v89
    %115 = vmatprep.subr.mxu0 0.0
    %116 = vmatpush1.msra.mxu0 %v90
    %117 = vmatprep.subr.mxu0 0.0
    %118 = vmatpush1.msra.mxu0 %v91
    %119 = vmatprep.subr.mxu0 0.0
    %120 = vmatpush1.msra.mxu0 %v92
    %121 = vmatprep.subr.mxu0 0.0
    %122 = vmatpush1.msra.mxu0 %v93
    %123 = vmatprep.subr.mxu0 0.0
    %124 = vmatpush1.msra.mxu0 %v94
    %125 = vmatprep.subr.mxu0 0.0
    %126 = vmatpush1.msra.mxu0 %v95
    %127 = vmatprep.subr.mxu0 0.0
    %128 = vmatpush1.msra.mxu0 %v96
    %129 = vmatprep.subr.mxu0 0.0
    %130 = vmatpush1.msra.mxu0 %v97
    %131 = vmatprep.subr.mxu0 0.0
    %132 = vmatpush1.msra.mxu0 %v98
    %133 = vmatprep.subr.mxu0 0.0
    %134 = vmatpush1.msra.mxu0 %v99
    %135 = vmatprep.subr.mxu0 0.0
    %136 = vmatpush1.msra.mxu0 %v100
    %137 = vmatprep.subr.mxu0 0.0
    %138 = vmatpush1.msra.mxu0 0.0
    %139 = vmatprep.subr.mxu0 0.0
    %140 = vmatpush1.msra.mxu0 0.0
    %141 = vmatprep.subr.mxu0 0.0
    %142 = vmatpush1.msra.mxu0 0.0
    %143 = vmatprep.subr.mxu0 0.0
    %144 = vmatpush1.msra.mxu0 0.0
    %145 = vmatprep.subr.mxu0 0.0
    %146 = vmatpush1.msra.mxu0 0.0
    %147 = vmatprep.subr.mxu0 0.0
    %148 = vmatpush1.msra.mxu0 0.0
    %149 = vmatprep.subr.mxu0 0.0
    %150 = vmatpush1.msra.mxu0 0.0
    %151 = vmatprep.subr.mxu0 0.0
    %152 = vmatpush1.msra.mxu0 0.0
    %153 = vmatprep.subr.mxu0 0.0
    %154 = vmatpush1.msra.mxu0 0.0
    %155 = vmatprep.subr.mxu0 0.0
    %156 = vmatpush1.msra.mxu0 0.0
    %157 = vmatprep.subr.mxu0 0.0
    %158 = vmatpush1.msra.mxu0 0.0
    %159 = vmatprep.subr.mxu0 0.0
    %160 = vmatpush1.msra.mxu0 0.0
    %161 = vmatprep.subr.mxu0 0.0
    %162 = vmatpush1.msra.mxu0 0.0
    %163 = vmatprep.subr.mxu0 0.0
    %164 = vmatpush1.msra.mxu0 0.0
    %165 = vmatprep.subr.mxu0 0.0
    %166 = vmatpush1.msra.mxu0 0.0
    %167 = vmatprep.subr.mxu0 0.0
    %168 = vmatpush1.msra.mxu0 0.0
    %169 = vmatprep.mubr.f32.mxu0 0.0
    %170 = vmatmul.mubr.f32.gmra.mrb[0].mxu0 %v84
    %v171 = vpop.f32.mrb[0].mxu0
    %v172 = vadd.f32 %v104, %v171
    %v173 = vpop.f32.mrb[0].mxu0
    %174 = vdwg.mxu0
    %v175 = vtanh.pop %v172
    %s176 = scalar_lea.vmem [#allocation6], 128
    %v177 = vld [vmem:[%s176] sm:$0xff]
    %v178 = vld [vmem:[%s176 + $0x8] sm:$0xff]
    %v179 = vld [vmem:[%s176 + $0x10] sm:$0xff]
    %v180 = vld [vmem:[%s176 + $0x18] sm:$0xff]
    %v181 = vld [vmem:[%s176 + $0x20] sm:$0xff]
    %v182 = vld [vmem:[%s176 + $0x28] sm:$0xff]
    %v183 = vld [vmem:[%s176 + $0x30] sm:$0xff]
    %v184 = vld [vmem:[%s176 + $0x38] sm:$0xff]
    %v185 = vld [vmem:[%s176 + $0x40] sm:$0xff]
    %v186 = vld [vmem:[%s176 + $0x48] sm:$0xff]
    %v187 = vld [vmem:[%s176 + $0x50] sm:$0xff]
    %v188 = vld [vmem:[%s176 + $0x58] sm:$0xff]
    %v189 = vld [vmem:[%s176 + $0x60] sm:$0xff]
    %v190 = vld [vmem:[%s176 + $0x68] sm:$0xff]
    %v191 = vld [vmem:[%s176 + $0x70] sm:$0xff]
    %v192 = vld [vmem:[%s176 + $0x78] sm:$0xff]
    %v193 = vlaneseq
    %v194 = vshrl.u32 %v193, 7
    %v195 = vsub.s32 0, %v194
    %v196 = vrot.slane %v61, %v195
    %197 = vmatprep.subr.mxu0 0.0
    %198 = vmatpush1.msra.mxu0 %v177
    %199 = vmatprep.subr.mxu0 0.0
    %200 = vmatpush1.msra.mxu0 %v178
    %201 = vmatprep.subr.mxu0 0.0
    %202 = vmatpush1.msra.mxu0 %v179
    %203 = vmatprep.subr.mxu0 0.0
    %204 = vmatpush1.msra.mxu0 %v180
    %205 = vmatprep.subr.mxu0 0.0
    %206 = vmatpush1.msra.mxu0 %v181
    %207 = vmatprep.subr.mxu0 0.0
    %208 = vmatpush1.msra.mxu0 %v182
    %209 = vmatprep.subr.mxu0 0.0
    %210 = vmatpush1.msra.mxu0 %v183
    %211 = vmatprep.subr.mxu0 0.0
    %212 = vmatpush1.msra.mxu0 %v184
    %213 = vmatprep.subr.mxu0 0.0
    %214 = vmatpush1.msra.mxu0 %v185
    %215 = vmatprep.subr.mxu0 0.0
    %216 = vmatpush1.msra.mxu0 %v186
    %217 = vmatprep.subr.mxu0 0.0
    %218 = vmatpush1.msra.mxu0 %v187
    %219 = vmatprep.subr.mxu0 0.0
    %220 = vmatpush1.msra.mxu0 %v188
    %221 = vmatprep.subr.mxu0 0.0
    %222 = vmatpush1.msra.mxu0 %v189
    %223 = vmatprep.subr.mxu0 0.0
    %224 = vmatpush1.msra.mxu0 %v190
    %225 = vmatprep.subr.mxu0 0.0
    %226 = vmatpush1.msra.mxu0 %v191
    %227 = vmatprep.subr.mxu0 0.0
    %228 = vmatpush1.msra.mxu0 %v192
    %229 = vmatprep.subr.mxu0 0.0
    %230 = vmatpush1.msra.mxu0 0.0
    %231 = vmatprep.subr.mxu0 0.0
    %232 = vmatpush1.msra.mxu0 0.0
    %233 = vmatprep.subr.mxu0 0.0
    %234 = vmatpush1.msra.mxu0 0.0
    %235 = vmatprep.subr.mxu0 0.0
    %236 = vmatpush1.msra.mxu0 0.0
    %237 = vmatprep.subr.mxu0 0.0
    %238 = vmatpush1.msra.mxu0 0.0
    %239 = vmatprep.subr.mxu0 0.0
    %240 = vmatpush1.msra.mxu0 0.0
    %241 = vmatprep.subr.mxu0 0.0
    %242 = vmatpush1.msra.mxu0 0.0
    %243 = vmatprep.subr.mxu0 0.0
    %244 = vmatpush1.msra.mxu0 0.0
    %245 = vmatprep.subr.mxu0 0.0
    %246 = vmatpush1.msra.mxu0 0.0
    %247 = vmatprep.subr.mxu0 0.0
    %248 = vmatpush1.msra.mxu0 0.0
    %249 = vmatprep.subr.mxu0 0.0
    %250 = vmatpush1.msra.mxu0 0.0
    %251 = vmatprep.subr.mxu0 0.0
    %252 = vmatpush1.msra.mxu0 0.0
    %253 = vmatprep.subr.mxu0 0.0
    %254 = vmatpush1.msra.mxu0 0.0
    %255 = vmatprep.subr.mxu0 0.0
    %256 = vmatpush1.msra.mxu0 0.0
    %257 = vmatprep.subr.mxu0 0.0
    %258 = vmatpush1.msra.mxu0 0.0
    %259 = vmatprep.subr.mxu0 0.0
    %260 = vmatpush1.msra.mxu0 0.0
    %261 = vmatprep.mubr.f32.mxu0 0.0
    %262 = vmatmul.mubr.f32.gmra.mrb[0].mxu0 %v175
    %v263 = vpop.f32.mrb[0].mxu0
    %v264 = vadd.f32 %v196, %v263
    %v265 = vpop.f32.mrb[0].mxu0
    %266 = vdwg.mxu0
    %v267 = vtanh.pop %v264
    %v268 = vlaneseq
    %v269 = vshrl.u32 %v268, 7
    %v270 = vsub.s32 0, %v269
    %v271 = vrot.slane %v62, %v270
    %v272 = vmul.f32 %v267, %v271
    %273 = vadd.xlane.f32.xlu0 %v272
    %v274 = vpop.xlane.xlu0 %273
    %v275 = vstv %s57
    %v276 = vadd.f32 %v274, %v275
    %277 = vst [vmem:[#allocation7] sm:$0xff] 0.0
    %vm278 = vcmask 7168
    %279 = vst.msk [vmem:[#allocation7] sm:$0xff] %vm278, %v64
    %281 = vrot.lane.b32.xlu0 %v68, 1
    %v282 = vpop.permute.xlu0 %281
    %vm284 = vcmask 15368
    %285 = vst.msk [vmem:[#allocation7] sm:$0xff] %vm284, %v282
    %vm286 = vcmask 23568
    %287 = vst.msk [vmem:[#allocation7] sm:$0xff] %vm286, %v276
    // Predicated region
    $region34: #{tpu_custom_call.1} parent=1 // pred_check
      _
    $region35: #{tpu_custom_call.1} parent=1 // pred_check_branch
      %289 = sbr.rel (0) target = $region37
    $region36: #{tpu_custom_call.1} parent=1 // pred_region
      %s291 = ssub.s32 128, 128
      %292 = vsyncadd [#allocation4], %s291
      %s294 = sshll.u32 [#allocation7], 4
      %s295 = int_to_ptr.vmem [resolvable:$true] %s294
      %297 = dma.vmem_to_hbm [thread:$0]  %s295, 128, %s6, [#allocation4]
    $region37: #{tpu_custom_call.1} parent=1 // pred_fallthru
      _
    // Predicated region
    $region38: #{tpu_custom_call.1} parent=1 // pred_check
      _
    $region39: #{tpu_custom_call.1} parent=1 // pred_check_branch
      %299 = sbr.rel (0) target = $region41
    $region40: #{tpu_custom_call.1} parent=1 // pred_region
      %300 = dma.done [#allocation4], 128
    $region41: #{tpu_custom_call.1} parent=1 // pred_fallthru
      _
    %301 = vsyncpa [#allocation3], 1
    %302 = vsyncpa [#allocation4], 1
    %303 = vsyncpa [#allocation5], 1

</llo_original>
